<compile_context>
chip_gen: v7x
topology: tpu7x:2x2x1
jax: 0.10.0
libtpu: 0.0.40
codegen_flags: <defaults>
</compile_context>

<pallas_src>
import jax
import jax.numpy as jnp
from jax.experimental import pallas as pl
from jax.experimental.pallas import tpu as pltpu


def _rating_kernel(x_ref, w_ref, b_ref, o_ref):
    # x_ref: (tm, H) VMEM; w_ref: (1, H) VMEM; b_ref: (1, 1) SMEM; o_ref: (1, tm) VMEM.
    x = x_ref[...].astype(jnp.float32)
    w = w_ref[...].astype(jnp.float32)               # (1, H) broadcasts over tm rows
    # VPU multiply + XLU lane reduce (keeps accumulation in f32); no MXU for N=1.
    logits = jnp.sum(x * w, axis=-1, keepdims=True)  # (tm, 1)
    logits = logits + b_ref[0, 0]
    # One XLU swizzle per tile -> lane-dense (1, tm) store.
    o_ref[...] = jax.nn.sigmoid(logits).reshape(1, -1).astype(o_ref.dtype)


def _round_up(a, b):
    return -(-a // b) * b


def _choose_tile(M, H, itemsize, tm_max, vmem_budget_bytes):
    """Largest row tile whose double-buffered input slab fits the VMEM budget."""
    h_pad = _round_up(H, 128)                         # lane padding in VMEM
    fit = vmem_budget_bytes // (2 * h_pad * itemsize)  # 2x for double buffering
    fit = max(128, (fit // 128) * 128)                 # multiple of 128 lanes for output
    tm = min(tm_max, fit)
    m_pad8 = _round_up(M, 8)
    if m_pad8 <= tm:
        # Single tile covering everything (block == full array, so any multiple of 8 ok).
        # TODO(synk): for v7x (2 TCs) a single-tile grid leaves one core idle; only
        # matters when M itself is tiny.
        return m_pad8
    return tm


def rating_predictor(x, weight, bias, *, tm_max=2048, input_dtype=None):
    """x: (B, S, H); weight: (1, H) (PyTorch Linear layout); bias: (1,).

    Returns sigmoid(x @ weight.T + bias).squeeze(-1) of shape (B, S).
    `input_dtype=jnp.bfloat16` optionally halves input HBM traffic (accumulation
    and sigmoid stay in f32 inside the kernel).
    """
    B, S, H = x.shape
    M = B * S

    x2d = x.reshape(M, H)
    if input_dtype is not None:
        x2d = x2d.astype(input_dtype)
    itemsize = jnp.dtype(x2d.dtype).itemsize

    tm = _choose_tile(M, H, itemsize, tm_max, 24 << 20)
    num_tiles = pl.cdiv(M, tm)
    M_pad = num_tiles * tm
    if M_pad != M:
        x2d = jnp.pad(x2d, ((0, M_pad - M), (0, 0)))   # zero rows, sliced off below

    w = weight.reshape(1, H).astype(jnp.float32)       # (1, H): lane-dense, ~no VMEM padding
    b = bias.reshape(1, 1).astype(jnp.float32)         # scalar in SMEM

    out = pl.pallas_call(
        _rating_kernel,
        out_shape=jax.ShapeDtypeStruct((1, M_pad), jnp.float32),
        grid_spec=pltpu.PrefetchScalarGridSpec(
            num_scalar_prefetch=0,
            grid=(num_tiles,),
            in_specs=[
                pl.BlockSpec((tm, H), lambda i: (i, 0)),
                pl.BlockSpec((1, H), lambda i: (0, 0)),
                pl.BlockSpec((1, 1), lambda i: (0, 0), memory_space=pltpu.SMEM),
            ],
            out_specs=pl.BlockSpec((1, tm), lambda i: (0, i)),
        ),
        compiler_params=pltpu.CompilerParams(
            dimension_semantics=("parallel",),
            vmem_limit_bytes=32 << 20,
        ),
    )(x2d, w, b)

    return out.reshape(M_pad)[:M].reshape(B, S)        # drop padding; squeeze(dim=-1)


def init_params(key, hidden_size):
    """Deterministic init matching nn.Linear(hidden, 1) with xavier_uniform_ weight."""
    kw, kb = jax.random.split(key)
    # xavier_uniform_: bound = sqrt(6 / (fan_in + fan_out)), fan_out = 1
    wbound = (6.0 / (hidden_size + 1)) ** 0.5
    weight = jax.random.uniform(kw, (1, hidden_size), jnp.float32, -wbound, wbound)
    # nn.Linear default bias init: uniform(-1/sqrt(fan_in), 1/sqrt(fan_in))
    bbound = 1.0 / (hidden_size ** 0.5)
    bias = jax.random.uniform(kb, (1,), jnp.float32, -bbound, bbound)
    return weight, bias


if __name__ == "__main__":
    key = jax.random.PRNGKey(0)
    k_x, k_p, k_x2 = jax.random.split(key, 3)

    # Small shapes consistent with the module: batch=2, seq=8, hidden=32.
    B, S, H = 2, 8, 32
    x = jax.random.normal(k_x, (B, S, H), jnp.float32)
    weight, bias = init_params(k_p, H)

    out = jax.block_until_ready(rating_predictor(x, weight, bias))
    ref = jax.nn.sigmoid(jnp.einsum("bsh,h->bs", x, weight[0]) + bias[0])
    assert out.shape == (B, S)
    assert jnp.allclose(out, ref, atol=1e-5, rtol=1e-5)

    # Also exercise the multi-tile (grid > 1) + tail-padding path.
    B2, S2, H2 = 3, 100, 64
    x2 = jax.random.normal(k_x2, (B2, S2, H2), jnp.float32)
    w2, b2 = init_params(k_p, H2)
    out2 = jax.block_until_ready(rating_predictor(x2, w2, b2, tm_max=128))
    ref2 = jax.nn.sigmoid(jnp.einsum("bsh,h->bs", x2, w2[0]) + b2[0])
    assert out2.shape == (B2, S2)
    assert jnp.allclose(out2, ref2, atol=1e-5, rtol=1e-5)

    print("KERNEL_OK")
</pallas_src>

<mosaic_0001>
module attributes {stable_mosaic.version = 11 : i64} {
  func.func @_rating_kernel(%arg0: i32, %arg1: memref<16x32xf32, #tpu.memory_space<vmem>>, %arg2: memref<1x32xf32, #tpu.memory_space<vmem>>, %arg3: memref<1x1xf32, #tpu.memory_space<smem>>, %arg4: memref<1x16xf32, #tpu.memory_space<vmem>>) attributes {dimension_semantics = [#tpu.dimension_semantics<parallel>], iteration_bounds = array<i64: 1>, scalar_prefetch = 0 : i64, scratch_operands = 0 : i64, tpu.core_type = #tpu.core_type<tc>, window_params = [{transform_indices = @transform_0, window_bounds = array<i64: 16, 32>}, {pipeline_mode = #tpu.pipeline_mode<synchronous>, transform_indices = @transform_1, window_bounds = array<i64: 1, 32>}, {transform_indices = @transform_2, window_bounds = array<i64: 1, 1>}, {transform_indices = @transform_3, window_bounds = array<i64: 1, 16>}]} {
    %c0 = arith.constant 0 : index
    %c0_0 = arith.constant 0 : index
    %0 = vector.load %arg1[%c0, %c0_0] : memref<16x32xf32, #tpu.memory_space<vmem>>, vector<16x32xf32>
    %c0_1 = arith.constant 0 : index
    %c0_2 = arith.constant 0 : index
    %1 = vector.load %arg2[%c0_1, %c0_2] : memref<1x32xf32, #tpu.memory_space<vmem>>, vector<1x32xf32>
    %2 = vector.broadcast %1 : vector<1x32xf32> to vector<16x32xf32>
    %3 = arith.mulf %0, %2 : vector<16x32xf32>
    %cst = arith.constant dense<0.000000e+00> : vector<16xf32>
    %4 = vector.multi_reduction <add>, %3, %cst [1] : vector<16x32xf32> to vector<16xf32>
    %5 = vector.shape_cast %4 : vector<16xf32> to vector<16x1xf32>
    %c0_3 = arith.constant 0 : index
    %c0_4 = arith.constant 0 : index
    %6 = memref.load %arg3[%c0_3, %c0_4] : memref<1x1xf32, #tpu.memory_space<smem>>
    %7 = vector.broadcast %6 : f32 to vector<16x1xf32>
    %8 = arith.addf %5, %7 : vector<16x1xf32>
    %9 = arith.negf %8 : vector<16x1xf32>
    %10 = math.exp %9 : vector<16x1xf32>
    %cst_5 = arith.constant 1.000000e+00 : f32
    %11 = vector.broadcast %cst_5 : f32 to vector<16x1xf32>
    %12 = arith.addf %11, %10 : vector<16x1xf32>
    %13 = arith.divf %11, %12 : vector<16x1xf32>
    %14 = vector.shape_cast %13 : vector<16x1xf32> to vector<1x16xf32>
    %c0_6 = arith.constant 0 : index
    %c0_7 = arith.constant 0 : index
    %15 = vector.load %arg4[%c0_6, %c0_7] : memref<1x16xf32, #tpu.memory_space<vmem>>, vector<1x16xf32>
    tpu.vector_store %arg4[%c0_6, %c0_7], %14 {strides = array<i32>} : memref<1x16xf32, #tpu.memory_space<vmem>>, vector<1x16xf32>,
    return
  }
  func.func @transform_0(%arg0: i32) -> (i32, i32) {
    %c0_i32 = arith.constant 0 : i32
    %c0_i32_0 = arith.constant 0 : i32
    return %arg0, %c0_i32 : i32, i32
  }
  func.func @transform_1(%arg0: i32) -> (i32, i32) {
    %c0_i32 = arith.constant 0 : i32
    %c0_i32_0 = arith.constant 0 : i32
    %c0_i32_1 = arith.constant 0 : i32
    return %c0_i32, %c0_i32_0 : i32, i32
  }
  func.func @transform_2(%arg0: i32) -> (i32, i32) {
    %c0_i32 = arith.constant 0 : i32
    %c0_i32_0 = arith.constant 0 : i32
    %c0_i32_1 = arith.constant 0 : i32
    return %c0_i32, %c0_i32_0 : i32, i32
  }
  func.func @transform_3(%arg0: i32) -> (i32, i32) {
    %c0_i32 = arith.constant 0 : i32
    %c0_i32_0 = arith.constant 0 : i32
    return %c0_i32, %arg0 : i32, i32
  }
}

</mosaic_0001>

<llo_original>
// kernel: tpu_custom_call.1
$region0: #{tpu_custom_call.1}
  #allocation0 [shape = 'u32[]', space=smem, size = 0x4, offset = 0x4, fixed_abs, tag = 'smem constant byte address 0x4 - core index']
  #allocation1 [shape = 'u32[144,128]{1,0:T(1,128)}', space=vmem, size = 0x12000, scoped, tag = 'internal scratch']
  #allocation2 [shape = 'f32[1,1]{1,0:T(1,128)S(6)}', space=smem, size = 0x200, scoped, tag = 'scoped memory for tpu_custom_call.1']
  %s0 = inlined_call_operand.hbm [shape: f32[16,32], index: 0, kind: input, shape index: {}]
  %s1 = inlined_call_operand.vmem [shape: f32[1,32], index: 1, kind: input, shape index: {}]
  %s2 = inlined_call_operand.<no memory space> [shape: f32[1,1], index: 2, kind: input, shape index: {}]
  %s3 = inlined_call_operand.hbm [shape: f32[1,16], index: 3, kind: output, shape index: {}]
  %s4 = sld [smem:[#allocation0]]
  $region26: #{tpu_custom_call.1} parent=0
    _
  %s6 = ssub.s32 1, %s4
  %s7 = scalar_select 0, %s6, %s4
  %8 = sst [smem:[#allocation2]] %s2
  $region1: #{tpu_custom_call.1} parent=0
    #allocation3 [shape = 'u8[8192]{0}', space=vmem, size = 0x2000, scoped, tag = 'input window, operand 0, single buffered']
    #allocation4 [shape = 's32[1]{0}', space=sflag, size = 0x4, scoped, tag = 'scoped memory for tpu_custom_call.1']
    #allocation5 [shape = 's32[1]{0}', space=sflag, size = 0x4, scoped, tag = 'scoped memory for tpu_custom_call.1']
    #allocation6 [shape = 'u8[512]{0}', space=vmem, size = 0x400, scoped, tag = 'output window, operand 0, single buffered']
    %9 = vsyncpa [#allocation4], 0
    %10 = vsyncpa [#allocation5], 0
    // Predicated region
    $region2: #{tpu_custom_call.1} parent=1 // pred_check
      _
    $region3: #{tpu_custom_call.1} parent=1 // pred_check_branch
      %12 = sbr.rel (0) target = $region5
    $region4: #{tpu_custom_call.1} parent=1 // pred_region
      %s14 = ssub.s32 256, 256
      %15 = vsyncadd [#allocation4], %s14
      %s16 = sshll.u32 [#allocation3], 4
      %s17 = int_to_ptr.vmem [resolvable:$true] %s16
      %22 = dma.hbm_to_vmem [thread:$0]  %s0, 256, %s17, [#allocation4], 128, 128, 8
    $region5: #{tpu_custom_call.1} parent=1 // pred_fallthru
      _
    // Predicated region
    $region6: #{tpu_custom_call.1} parent=1 // pred_check
      _
    $region7: #{tpu_custom_call.1} parent=1 // pred_check_branch
      %24 = sbr.rel (0) target = $region9
    $region8: #{tpu_custom_call.1} parent=1 // pred_region
      _
    $region9: #{tpu_custom_call.1} parent=1 // pred_fallthru
      _
    // Predicated region
    $region10: #{tpu_custom_call.1} parent=1 // pred_check
      _
    $region11: #{tpu_custom_call.1} parent=1 // pred_check_branch
      %26 = sbr.rel (0) target = $region13
    $region12: #{tpu_custom_call.1} parent=1 // pred_region
      _
    $region13: #{tpu_custom_call.1} parent=1 // pred_fallthru
      _
    // Predicated region
    $region14: #{tpu_custom_call.1} parent=1 // pred_check
      _
    $region15: #{tpu_custom_call.1} parent=1 // pred_check_branch
      %28 = sbr.rel (0) target = $region17
    $region16: #{tpu_custom_call.1} parent=1 // pred_region
      %29 = dma.done [#allocation4], 256
    $region17: #{tpu_custom_call.1} parent=1 // pred_fallthru
      _
    %v30 = vld [vmem:[#allocation3] sm:$0xff]
    %v31 = vld [vmem:[#allocation3 + $0x8] sm:$0xff]
    %v32 = vld [vmem:[%s1] sm:$0x1]
    %v34 = vlaneseq
    %v35 = vshrl.u32 %v34, 7
    %v36 = vsub.s32 0, %v35
    %v37 = vrot.slane %v32, %v36
    %v39 = vmul.f32 %v30, %v37
    %v40 = vmul.f32 %v31, %v37
    %vm41 = vcmask 261120
    %v42 = vsel %vm41, %v39, 0.0
    %43 = vadd.xlane.f32.xlu0 %v42
    %v44 = vpop.xlane.xlu0 %43
    %v45 = vsel %vm41, %v40, 0.0
    %46 = vadd.xlane.f32.xlu0 %v45
    %v47 = vpop.xlane.xlu0 %46
    %s48 = sld [smem:[#allocation2]]
    %v49 = vstv %s48
    %v50 = vadd.f32 %v44, %v49
    %v51 = vadd.f32 %v47, %v49
    %v52 = vxor.u32 %v50, 2147483648
    %v53 = vxor.u32 %v51, 2147483648
    %v54 = vmul.f32 %v52, 1.442695
    %v55 = vpow.pop %v54
    %v56 = vmul.f32 %v53, 1.442695
    %v57 = vpow.pop %v56
    %v58 = vadd.f32 %v55, 1.0
    %v59 = vadd.f32 %v57, 1.0
    %v60 = vrcp.pop %v58
    %v61 = vmul.f32 1.0, %v60
    %v62 = vrcp.pop %v59
    %v63 = vmul.f32 1.0, %v62
    %v66 = vlaneseq
    %v67 = vand.u32 %v66, 127
    %v68 = vlaneseq
    %v69 = vshrl.u32 %v68, 7
    %v70 = vsub.s32 %v67, %v69
    %v71 = vrot.slane %v61, %v70
    %v72 = vadd.s32 %v67, 4294967288
    %v73 = vlaneseq
    %v74 = vshrl.u32 %v73, 7
    %v75 = vsub.s32 %v72, %v74
    %v76 = vrot.slane %v63, %v75
    %vm77 = vcmask 130112
    %v78 = vsel %vm77, %v76, %v71
    %vm80 = vcmask 122880
    %81 = vst.msk [vmem:[#allocation6] sm:$0x1] %vm80, %v78
    // Predicated region
    $region18: #{tpu_custom_call.1} parent=1 // pred_check
      _
    $region19: #{tpu_custom_call.1} parent=1 // pred_check_branch
      %83 = sbr.rel (0) target = $region21
    $region20: #{tpu_custom_call.1} parent=1 // pred_region
      %s85 = ssub.s32 16, 16
      %86 = vsyncadd [#allocation5], %s85
      %s88 = sshll.u32 [#allocation6], 4
      %s89 = int_to_ptr.vmem [resolvable:$true] %s88
      %91 = dma.vmem_to_hbm [thread:$0]  %s89, 16, %s3, [#allocation5]
    $region21: #{tpu_custom_call.1} parent=1 // pred_fallthru
      _
    // Predicated region
    $region22: #{tpu_custom_call.1} parent=1 // pred_check
      _
    $region23: #{tpu_custom_call.1} parent=1 // pred_check_branch
      %93 = sbr.rel (0) target = $region25
    $region24: #{tpu_custom_call.1} parent=1 // pred_region
      %94 = dma.done [#allocation5], 16
    $region25: #{tpu_custom_call.1} parent=1 // pred_fallthru
      _
    %95 = vsyncpa [#allocation4], 1
    %96 = vsyncpa [#allocation5], 1

</llo_original>
